<compile_context>
chip_gen: v6e
topology: v6e:2x2x1
jax: 0.10.0
libtpu: 0.0.40
codegen_flags: <defaults>
</compile_context>

<pallas_src>
import jax
import jax.numpy as jnp
from jax.experimental import pallas as pl
from jax.experimental.pallas import tpu as pltpu


def _round_up(x, m):
    return (x + m - 1) // m * m


def _bigram_fwd_kernel(emb_ref, w_ref, b_ref, o_ref):
    """One (vocab tile, batch tile) grid step.

    emb_ref : VMEM (TB, E)   gathered embedding rows (compute dtype, e.g. bf16).
    w_ref   : VMEM (E, TV)   pre-transposed Linear weight tile (compute dtype).
    b_ref   : VMEM (1, TV)   bias tile (f32).
    o_ref   : VMEM (TB, TV)  logits tile.
    """
    logits = jnp.dot(emb_ref[...], w_ref[...],
                     preferred_element_type=jnp.float32)      # MXU, f32 accum
    o_ref[...] = (logits + b_ref[...]).astype(o_ref.dtype)
    # Dropout: eval-mode identity (see TODO at top of file).


def prepare_bigram_params(emb_table, linear_w, linear_b, *,
                          compute_dtype=jnp.bfloat16):
    """One-time (init-path) parameter plumbing: transpose, pad, cast.

    Hoisted out of the per-call path so the (V, E) -> (E, V) weight transpose
    and the bf16 cast are not an extra HBM read+write of the weight on every
    forward call.
    """
    V, E = emb_table.shape
    V_pad = _round_up(V, 128)                       # lane-dense vocab
    w_t = jnp.asarray(linear_w, jnp.float32).T      # (E, V): contract w/o .T in-kernel
    bias = jnp.asarray(linear_b, jnp.float32)
    if V_pad != V:
        w_t = jnp.pad(w_t, ((0, 0), (0, V_pad - V)))
        bias = jnp.pad(bias, (0, V_pad - V))
    w_t = w_t.astype(compute_dtype)                 # halves weight HBM traffic
    bias2d = bias.reshape(1, V_pad)                 # (1, V_pad), f32
    emb_table = jnp.asarray(emb_table, jnp.float32)
    return emb_table, w_t, bias2d, V


def bigram_forward(tokens, emb_table, w_t, bias2d, vocab_size, *,
                   batch_tile=None, vocab_tile=None, out_dtype=jnp.float32):
    """Forward pass: (B, 1) or (B,) token ids -> (B, vocab_size) logits."""
    if tokens.ndim == 2:
        tokens = tokens[:, 0]                       # .squeeze(1) of (B, 1)
    tokens = tokens.astype(jnp.int32)
    B = tokens.shape[0]
    E, V_pad = w_t.shape
    compute_dtype = w_t.dtype
    cbytes = jnp.dtype(compute_dtype).itemsize

    # Embedding gather outside the kernel: one (B, E) slab instead of B tiny DMAs.
    embeds = jnp.take(emb_table, tokens, axis=0).astype(compute_dtype)   # (B, E)

    # Batch tiling: fill MXU rows, sublane-dense stores.
    if batch_tile is None:
        batch_tile = min(_round_up(B, 8), 256)
    B_pad = _round_up(B, batch_tile)
    if B_pad != B:
        embeds = jnp.pad(embeds, ((0, B_pad - B), (0, 0)))

    # Vocab tiling: largest lane-dense tile whose weight slab fits the budget.
    if vocab_tile is None:
        budget = 4 * 1024 * 1024                    # single weight buffer, bytes
        vocab_tile = V_pad
        if E * vocab_tile * cbytes > budget:
            for cand in (4096, 2048, 1024, 512, 256, 128):
                if V_pad % cand == 0 and E * cand * cbytes <= budget:
                    vocab_tile = cand
                    break
            else:
                vocab_tile = 128 if V_pad % 128 == 0 else V_pad
    assert V_pad % vocab_tile == 0
    assert B_pad % batch_tile == 0

    n_bt = B_pad // batch_tile
    n_vt = V_pad // vocab_tile

    # Grid: vocab outer, batch inner -> the weight block index is constant
    # across the inner axis, keeping the (E, TV) weight VMEM-resident over the
    # whole batch (weight is streamed from HBM once, not B times).
    out = pl.pallas_call(
        _bigram_fwd_kernel,
        out_shape=jax.ShapeDtypeStruct((B_pad, V_pad), out_dtype),
        grid=(n_vt, n_bt),
        in_specs=[
            pl.BlockSpec((batch_tile, E), lambda j, b: (b, 0)),
            pl.BlockSpec((E, vocab_tile), lambda j, b: (0, j)),
            pl.BlockSpec((1, vocab_tile), lambda j, b: (0, j)),
        ],
        out_specs=pl.BlockSpec((batch_tile, vocab_tile), lambda j, b: (b, j)),
        compiler_params=pltpu.CompilerParams(
            dimension_semantics=("parallel", "parallel"),
            vmem_limit_bytes=32 * 1024 * 1024),
    )(embeds, w_t, bias2d)

    return out[:B, :vocab_size]


def bigram_forward_reference(tokens, emb_table, linear_w, linear_b):
    """Plain-JAX reference: dropout(linear(embedding(x).squeeze(1))), eval mode."""
    if tokens.ndim == 2:
        tokens = tokens[:, 0]
    embeds = jnp.asarray(emb_table, jnp.float32)[tokens]            # (B, E)
    return embeds @ jnp.asarray(linear_w, jnp.float32).T + jnp.asarray(linear_b, jnp.float32)


if __name__ == "__main__":
    # Small shapes consistent with the module: x is (batch_size, 1) token ids.
    B = 8
    vocab_size = 256     # multiple of 128 -> lane-dense logits tile
    embed_dim = 32

    key = jax.random.PRNGKey(0)
    k_tok, k_emb, k_w, k_b = jax.random.split(key, 4)

    tokens = jax.random.randint(k_tok, (B, 1), 0, vocab_size, dtype=jnp.int32)
    # Same init scheme as the PyTorch module (std=0.02); bias made nonzero to
    # actually exercise the bias path in the kernel.
    emb_table = 0.02 * jax.random.normal(k_emb, (vocab_size, embed_dim), jnp.float32)
    linear_w = 0.02 * jax.random.normal(k_w, (vocab_size, embed_dim), jnp.float32)
    linear_b = 0.01 * jax.random.normal(k_b, (vocab_size,), jnp.float32)

    # One-time parameter prep (transpose / pad / bf16 cast), then forward.
    emb_tab_p, w_t, bias2d, V = prepare_bigram_params(
        emb_table, linear_w, linear_b, compute_dtype=jnp.bfloat16)
    out = bigram_forward(tokens, emb_tab_p, w_t, bias2d, V)
    out = jax.block_until_ready(out)

    ref = bigram_forward_reference(tokens, emb_table, linear_w, linear_b)
    assert out.shape == (B, vocab_size)
    # bf16 operands with f32 accumulation -> loosened tolerance vs f32 reference.
    assert jnp.allclose(out, ref, atol=2e-3, rtol=2e-2), "mismatch vs reference"

    print("KERNEL_OK")
</pallas_src>

<mosaic_0001>
module attributes {stable_mosaic.version = 11 : i64} {
  func.func @_bigram_fwd_kernel(%arg0: i32, %arg1: i32, %arg2: memref<8x32xbf16, #tpu.memory_space<vmem>>, %arg3: memref<32x256xbf16, #tpu.memory_space<vmem>>, %arg4: memref<1x256xf32, #tpu.memory_space<vmem>>, %arg5: memref<8x256xf32, #tpu.memory_space<vmem>>) attributes {dimension_semantics = [#tpu.dimension_semantics<parallel>, #tpu.dimension_semantics<parallel>], iteration_bounds = array<i64: 1, 1>, scalar_prefetch = 0 : i64, scratch_operands = 0 : i64, tpu.core_type = #tpu.core_type<tc>, window_params = [{transform_indices = @transform_0, window_bounds = array<i64: 8, 32>}, {transform_indices = @transform_1, window_bounds = array<i64: 32, 256>}, {transform_indices = @transform_2, window_bounds = array<i64: 1, 256>}, {transform_indices = @transform_3, window_bounds = array<i64: 8, 256>}]} {
    %c0 = arith.constant 0 : index
    %c0_0 = arith.constant 0 : index
    %0 = vector.load %arg2[%c0, %c0_0] : memref<8x32xbf16, #tpu.memory_space<vmem>>, vector<8x32xbf16>
    %c0_1 = arith.constant 0 : index
    %c0_2 = arith.constant 0 : index
    %1 = vector.load %arg3[%c0_1, %c0_2] : memref<32x256xbf16, #tpu.memory_space<vmem>>, vector<32x256xbf16>
    %cst = arith.constant dense<0.000000e+00> : vector<8x256xf32>
    %2 = tpu.matmul %0, %1, %cst {dimension_numbers = #tpu.dot_dimension_numbers<[1], [0], [0], [1], [0, 0, 1, 1], [], []>} : vector<8x32xbf16>, vector<32x256xbf16>, vector<8x256xf32> -> vector<8x256xf32>
    %c0_3 = arith.constant 0 : index
    %c0_4 = arith.constant 0 : index
    %3 = vector.load %arg4[%c0_3, %c0_4] : memref<1x256xf32, #tpu.memory_space<vmem>>, vector<1x256xf32>
    %4 = vector.broadcast %3 : vector<1x256xf32> to vector<8x256xf32>
    %5 = arith.addf %2, %4 : vector<8x256xf32>
    %c0_5 = arith.constant 0 : index
    %c0_6 = arith.constant 0 : index
    %6 = vector.load %arg5[%c0_5, %c0_6] : memref<8x256xf32, #tpu.memory_space<vmem>>, vector<8x256xf32>
    tpu.vector_store %arg5[%c0_5, %c0_6], %5 {strides = array<i32>} : memref<8x256xf32, #tpu.memory_space<vmem>>, vector<8x256xf32>,
    return
  }
  func.func @transform_0(%arg0: i32, %arg1: i32) -> (i32, i32) {
    %c0_i32 = arith.constant 0 : i32
    %c0_i32_0 = arith.constant 0 : i32
    return %arg1, %c0_i32 : i32, i32
  }
  func.func @transform_1(%arg0: i32, %arg1: i32) -> (i32, i32) {
    %c0_i32 = arith.constant 0 : i32
    %c0_i32_0 = arith.constant 0 : i32
    return %c0_i32, %arg0 : i32, i32
  }
  func.func @transform_2(%arg0: i32, %arg1: i32) -> (i32, i32) {
    %c0_i32 = arith.constant 0 : i32
    %c0_i32_0 = arith.constant 0 : i32
    return %c0_i32, %arg0 : i32, i32
  }
  func.func @transform_3(%arg0: i32, %arg1: i32) -> (i32, i32) {
    %c0_i32 = arith.constant 0 : i32
    return %arg1, %arg0 : i32, i32
  }
}

</mosaic_0001>

<llo_original>
// kernel: tpu_custom_call.1
$region0: #{tpu_custom_call.1}
  #allocation0 [shape = 'u32[]', space=smem, size = 0x4, offset = 0x4, fixed_abs, tag = 'smem constant byte address 0x4 - core index']
  #allocation1 [shape = 'u32[144,128]{1,0:T(1,128)}', space=vmem, size = 0x12000, scoped, tag = 'internal scratch']
  %s0 = inlined_call_operand.hbm [shape: bf16[8,32], index: 0, kind: input, shape index: {}]
  %s1 = inlined_call_operand.hbm [shape: bf16[32,256], index: 1, kind: input, shape index: {}]
  %s2 = inlined_call_operand.vmem [shape: f32[1,256], index: 2, kind: input, shape index: {}]
  %s3 = inlined_call_operand.hbm [shape: f32[8,256], index: 3, kind: output, shape index: {}]
  %s4 = sld [smem:[#allocation0]]
  $region30: #{tpu_custom_call.1} parent=0
    _
  %s6 = ssub.s32 1, %s4
  %s7 = scalar_select 0, %s6, %s4
  $region1: #{tpu_custom_call.1} parent=0
    #allocation2 [shape = 'u8[2048]{0}', space=vmem, size = 0x800, scoped, tag = 'input window, operand 0, single buffered']
    #allocation3 [shape = 's32[1]{0}', space=sflag, size = 0x4, scoped, tag = 'scoped memory for tpu_custom_call.1']
    #allocation4 [shape = 's32[1]{0}', space=sflag, size = 0x4, scoped, tag = 'scoped memory for tpu_custom_call.1']
    #allocation5 [shape = 'u8[16384]{0}', space=vmem, size = 0x4000, scoped, tag = 'input window, operand 1, single buffered']
    #allocation6 [shape = 's32[1]{0}', space=sflag, size = 0x4, scoped, tag = 'scoped memory for tpu_custom_call.1']
    #allocation7 [shape = 'u8[8192]{0}', space=vmem, size = 0x2000, scoped, tag = 'output window, operand 0, single buffered']
    %8 = vsyncpa [#allocation3], 0
    %9 = vsyncpa [#allocation6], 0
    %10 = vsyncpa [#allocation4], 0
    // Predicated region
    $region2: #{tpu_custom_call.1} parent=1 // pred_check
      _
    $region3: #{tpu_custom_call.1} parent=1 // pred_check_branch
      %12 = sbr.rel (0) target = $region5
    $region4: #{tpu_custom_call.1} parent=1 // pred_region
      %s14 = ssub.s32 64, 64
      %15 = vsyncadd [#allocation3], %s14
      %s17 = sshll.u32 [#allocation2], 4
      %s18 = int_to_ptr.vmem [resolvable:$true] %s17
      %20 = dma.hbm_to_vmem [thread:$0]  %s0, 64, %s18, [#allocation3]
    $region5: #{tpu_custom_call.1} parent=1 // pred_fallthru
      _
    // Predicated region
    $region6: #{tpu_custom_call.1} parent=1 // pred_check
      _
    $region7: #{tpu_custom_call.1} parent=1 // pred_check_branch
      %22 = sbr.rel (0) target = $region9
    $region8: #{tpu_custom_call.1} parent=1 // pred_region
      %s24 = ssub.s32 512, 512
      %25 = vsyncadd [#allocation6], %s24
      %s26 = sshll.u32 [#allocation5], 4
      %s27 = int_to_ptr.vmem [resolvable:$true] %s26
      %32 = dma.hbm_to_vmem [thread:$0]  %s1, 512, %s27, [#allocation6], 128, 128, 8
    $region9: #{tpu_custom_call.1} parent=1 // pred_fallthru
      _
    // Predicated region
    $region10: #{tpu_custom_call.1} parent=1 // pred_check
      _
    $region11: #{tpu_custom_call.1} parent=1 // pred_check_branch
      %34 = sbr.rel (0) target = $region13
    $region12: #{tpu_custom_call.1} parent=1 // pred_region
      _
    $region13: #{tpu_custom_call.1} parent=1 // pred_fallthru
      _
    // Predicated region
    $region14: #{tpu_custom_call.1} parent=1 // pred_check
      _
    $region15: #{tpu_custom_call.1} parent=1 // pred_check_branch
      %36 = sbr.rel (0) target = $region17
    $region16: #{tpu_custom_call.1} parent=1 // pred_region
      %37 = dma.done [#allocation3], 64
    $region17: #{tpu_custom_call.1} parent=1 // pred_fallthru
      _
    // Predicated region
    $region18: #{tpu_custom_call.1} parent=1 // pred_check
      _
    $region19: #{tpu_custom_call.1} parent=1 // pred_check_branch
      %39 = sbr.rel (0) target = $region21
    $region20: #{tpu_custom_call.1} parent=1 // pred_region
      %40 = dma.done [#allocation6], 512
    $region21: #{tpu_custom_call.1} parent=1 // pred_fallthru
      _
    %v42 = vld [vmem:[#allocation2] sm:$0xf]
    %v43 = vld [vmem:[#allocation5] sm:$0xff]
    %v44 = vld [vmem:[#allocation5 + $0x8] sm:$0xff]
    %v45 = vld [vmem:[#allocation5 + $0x10] sm:$0xff]
    %v46 = vld [vmem:[#allocation5 + $0x18] sm:$0xff]
    %v47 = vld [vmem:[%s2] sm:$0x3]
    %v49 = vlaneseq
    %v50 = vshrl.u32 %v49, 7
    %v51 = vsub.s32 0, %v50
    %v52 = vrot.slane %v47, %v51
    %v53 = vlaneseq
    %v54 = vshrl.u32 %v53, 7
    %v55 = vsub.s32 1, %v54
    %v56 = vrot.slane %v47, %v55
    %v63 = vunpack.c.l.b16 %v43
    %v64 = vunpack.c.h.b16 %v43
    %v65 = vunpack.c.l.b16 %v44
    %v66 = vunpack.c.h.b16 %v44
    %v67 = vunpack.c.l.b16 %v45
    %v68 = vunpack.c.h.b16 %v45
    %v69 = vunpack.c.l.b16 %v46
    %v70 = vunpack.c.h.b16 %v46
    %v71 = vpack.c.b16 %v65, %v63
    %v72 = vpack.c.b16 %v66, %v64
    %v73 = vpack.c.b16 %v69, %v67
    %v74 = vpack.c.b16 %v70, %v68
    %vm79 = vcmask 261120
    %v81 = vsel %vm79, %v42, 0
    %83 = vmatprep.subr.bf16.mxu0 0
    %84 = vmatpush1.bf16.msra.mxu0 0
    %85 = vmatprep.subr.bf16.mxu0 0
    %86 = vmatpush1.bf16.msra.mxu0 0
    %87 = vmatprep.subr.bf16.mxu0 0
    %88 = vmatpush1.bf16.msra.mxu0 0
    %89 = vmatprep.subr.bf16.mxu0 0
    %90 = vmatpush1.bf16.msra.mxu0 0
    %91 = vmatprep.subr.bf16.mxu0 0
    %92 = vmatpush1.bf16.msra.mxu0 0
    %93 = vmatprep.subr.bf16.mxu0 0
    %94 = vmatpush1.bf16.msra.mxu0 0
    %95 = vmatprep.subr.bf16.mxu0 %v74
    %96 = vmatpush1.bf16.msra.mxu0 %v73
    %97 = vmatprep.subr.bf16.mxu0 %v72
    %98 = vmatpush1.bf16.msra.mxu0 %v71
    %99 = vmatprep.subr.bf16.mxu0 0
    %100 = vmatpush2.bf16.msra.mxu0 0
    %101 = vmatprep.subr.bf16.mxu0 0
    %102 = vmatpush2.bf16.msra.mxu0 0
    %103 = vmatprep.subr.bf16.mxu0 0
    %104 = vmatpush2.bf16.msra.mxu0 0
    %105 = vmatprep.subr.bf16.mxu0 0
    %106 = vmatpush2.bf16.msra.mxu0 0
    %107 = vmatprep.subr.bf16.mxu0 0
    %108 = vmatpush2.bf16.msra.mxu0 0
    %109 = vmatprep.subr.bf16.mxu0 0
    %110 = vmatpush2.bf16.msra.mxu0 0
    %111 = vmatprep.subr.bf16.mxu0 0
    %112 = vmatpush2.bf16.msra.mxu0 0
    %113 = vmatprep.subr.bf16.mxu0 0
    %114 = vmatpush2.bf16.msra.mxu0 0
    %115 = vmatprep.mubr.bf16.mxu0 0
    %116 = vmatmul.mubr.bf16.gmra.mxu0 %v81
    %v117 = vpop.f32.mrf.mxu0
    %v118 = vadd.f32 %v52, %v117
    %v119 = vpop.f32.mrf.mxu0
    %v120 = vadd.f32 %v56, %v119
    %v121 = vpop.f32.mrf.mxu0
    %v122 = vpop.f32.mrf.mxu0
    %123 = vdwg.mxu0
    %124 = vst [vmem:[#allocation7] sm:$0xff] %v118
    %125 = vst [vmem:[#allocation7 + $0x8] sm:$0xff] %v120
    // Predicated region
    $region22: #{tpu_custom_call.1} parent=1 // pred_check
      _
    $region23: #{tpu_custom_call.1} parent=1 // pred_check_branch
      %127 = sbr.rel (0) target = $region25
    $region24: #{tpu_custom_call.1} parent=1 // pred_region
      %s129 = ssub.s32 256, 256
      %130 = vsyncadd [#allocation4], %s129
      %s132 = sshll.u32 [#allocation7], 4
      %s133 = int_to_ptr.vmem [resolvable:$true] %s132
      %135 = dma.vmem_to_hbm [thread:$0]  %s133, 256, %s3, [#allocation4]
    $region25: #{tpu_custom_call.1} parent=1 // pred_fallthru
      _
    // Predicated region
    $region26: #{tpu_custom_call.1} parent=1 // pred_check
      _
    $region27: #{tpu_custom_call.1} parent=1 // pred_check_branch
      %137 = sbr.rel (0) target = $region29
    $region28: #{tpu_custom_call.1} parent=1 // pred_region
      %138 = dma.done [#allocation4], 256
    $region29: #{tpu_custom_call.1} parent=1 // pred_fallthru
      _
    %139 = vsyncpa [#allocation3], 1
    %140 = vsyncpa [#allocation6], 1
    %141 = vsyncpa [#allocation4], 1

</llo_original>
